<compile_context>
chip_gen: v5e
topology: v5e:2x2
jax: 0.10.0
libtpu: 0.0.40
codegen_flags: <defaults>
</compile_context>

<pallas_src>
import functools

import numpy as np
import jax
import jax.numpy as jnp
from jax.experimental import pallas as pl
from jax.experimental.pallas import tpu as pltpu


# Conservative scoped-VMEM budget used to size tiles: <= default scoped limit on
# v6e/v7x (32 MiB) and well under every generation's physical VMEM (128/128/64 MiB).
# On v5e (16 MiB default scoped) we raise the limit explicitly via vmem_limit_bytes.
_VMEM_BUDGET = 32 * 1024 * 1024


@functools.lru_cache(maxsize=None)
def _kron_shifted_dft(H, W):
    """(H*W, H*W) real/imag DFT matrices with fftshift folded in, transposed for
    right-multiplication (frequencies on columns), cached per (H, W).

    flat_spec[b, u*W + v] = sum_{h,w} fm[b, h, w] * exp(-2*pi*i*(u'*h/H + v'*w/W))
    with u' = (u - H//2) % H, v' = (v - W//2) % W.
    """
    def shifted(n):
        k = np.arange(n)
        u = (k - n // 2) % n
        ang = -2.0 * np.pi * np.outer(u, k) / n
        return np.cos(ang), np.sin(ang)

    hr, hi = shifted(H)
    wr, wi = shifted(W)
    d_re = np.kron(hr, wr) - np.kron(hi, wi)          # (H*W, H*W)
    d_im = np.kron(hr, wi) + np.kron(hi, wr)
    return (jnp.asarray(d_re.T, jnp.bfloat16),
            jnp.asarray(d_im.T, jnp.bfloat16))


def fa_kernel(x_ref, dre_ref, dim_ref, comp_ref, mag_ref, sum_ref, max_ref, *, inv_k):
    kstep = pl.program_id(2)

    @pl.when(kstep == 0)
    def _():
        sum_ref[...] = jnp.zeros_like(sum_ref)
        max_ref[...] = jnp.full_like(max_ref, -jnp.inf)

    # (TB, KC, HW) channel slab.  Up-cast in-kernel so bf16/f16 inputs never pay a
    # host-side f32 copy (kernel is HBM-read-bound).  The per-step cross-sublane
    # reduce is only over KC; the bulk of the channel reduction happens across the
    # arbitrary k grid axis as elementwise VPU add/max on the accumulators.
    xb = x_ref[...].astype(jnp.float32)
    sum_ref[...] = sum_ref[...] + jnp.sum(xb, axis=1)
    max_ref[...] = jnp.maximum(max_ref[...], jnp.max(xb, axis=1))

    @pl.when(kstep == pl.num_programs(2) - 1)
    def _():
        # ChannelPool(['avg', 'max']): mean over the group's channels + max over them.
        pooled = sum_ref[...] * inv_k + max_ref[...]                  # (TB, HW) f32
        comp_ref[0] = pooled

        # torch.fft.fft2 + torch.fft.fftshift as a Kronecker-DFT matmul pair on the
        # MXU: (TB, HW) @ (HW, HW), bf16 in, f32 accumulate.
        p16 = pooled.astype(jnp.bfloat16)
        f_re = jnp.dot(p16, dre_ref[...], preferred_element_type=jnp.float32)
        f_im = jnp.dot(p16, dim_ref[...], preferred_element_type=jnp.float32)

        # magnitude_spectrum = torch.abs(shift2center); stored bf16 to halve the write.
        mag_ref[0] = jnp.sqrt(f_re * f_re + f_im * f_im).astype(mag_ref.dtype)
        # phase_spectrum = torch.angle(...) is computed and immediately discarded by
        # the PyTorch module; we deliberately do not emit it (dead HBM write traffic).


def _vmem_bytes(tb, kc, hw, x_itemsize):
    x_blk = 2 * tb * kc * hw * x_itemsize          # double-buffered input slab
    dft = 2 * 2 * hw * hw * 2                      # two bf16 (HW,HW) constants, 2-buffered
    outs = 2 * tb * hw * 4 + 2 * tb * hw * 2       # f32 compress + bf16 magnitude blocks
    scratch = 2 * tb * hw * 4                      # running-sum + running-max accumulators
    return x_blk + dft + outs + scratch


def _choose_tiles(B, K, HW, x_itemsize, group):
    """VMEM-byte-budgeted (TB, KC).  Prefers an even number of parallel grid steps
    (v7x has 2 TensorCores), then fat batch tiles (MXU row fill), then fat channel
    slabs (fewer reduction steps)."""
    tb_cands = [tb for tb in (256, 128, 64, 32, 16, 8) if tb <= B and B % tb == 0]
    if not tb_cands:
        tb_cands = [B]                     # full batch dim is always a legal block dim
    if K % 8 == 0:
        kc_cands = [kc for kc in (K, 128, 64, 32, 16, 8) if kc <= K and K % kc == 0]
    else:
        kc_cands = [K]                     # only legal when group == 1 (full channel dim)

    best = None
    for tb in tb_cands:
        for kc in kc_cands:
            need = _vmem_bytes(tb, kc, HW, x_itemsize)
            if need > _VMEM_BUDGET:
                continue
            steps = group * (B // tb)      # parallel grid points (megacore sharding)
            key = (steps % 2 == 0, tb, kc)
            if best is None or key > best[0]:
                best = (key, tb, kc, need)
    if best is None:
        # TODO(synk): for large H*W switch to the separable (H,H)/(W,W) DFT form so the
        # constants drop from O(HW^2) bytes to KBs instead of failing here.
        raise ValueError(
            "FA Pallas kernel: (H*W, H*W) Kronecker-DFT constants exceed the "
            f"{_VMEM_BUDGET >> 20} MiB VMEM budget at H*W={HW}.")
    _, tb, kc, need = best
    return tb, kc, need


@functools.partial(jax.jit, static_argnames=("group",))
def _fa_intermediates(x, d_re, d_im, *, group):
    B, C, H, W = x.shape
    K = C // group
    HW = H * W

    TB, KC, need = _choose_tiles(B, K, HW, x.dtype.itemsize, group)
    ksteps = K // KC

    x_flat = x.reshape(B, C, HW)           # layout-only; no dtype conversion / copy

    grid_spec = pltpu.PrefetchScalarGridSpec(
        num_scalar_prefetch=0,
        grid=(group, B // TB, ksteps),
        in_specs=[
            # (TB, KC, HW) slab of group g, batch tile bt, channel step k.
            pl.BlockSpec((TB, KC, HW), lambda g, bt, k: (bt, g * ksteps + k, 0)),
            # Constant Kronecker-DFT matrices: constant index_map -> fetched once and
            # kept resident; their (double-buffered) footprint is charged to the VMEM
            # budget above.
            pl.BlockSpec((HW, HW), lambda g, bt, k: (0, 0)),
            pl.BlockSpec((HW, HW), lambda g, bt, k: (0, 0)),
        ],
        out_specs=[
            pl.BlockSpec((1, TB, HW), lambda g, bt, k: (g, bt, 0)),
            pl.BlockSpec((1, TB, HW), lambda g, bt, k: (g, bt, 0)),
        ],
        scratch_shapes=[
            pltpu.VMEM((TB, HW), jnp.float32),   # running channel sum
            pltpu.VMEM((TB, HW), jnp.float32),   # running channel max
        ],
    )

    out_shape = (jax.ShapeDtypeStruct((group, B, HW), jnp.float32),    # pooled map
                 jax.ShapeDtypeStruct((group, B, HW), jnp.bfloat16))   # magnitude

    vmem_limit = int(min(max(need + (4 << 20), 16 << 20), 48 << 20))

    compress, magnitude = pl.pallas_call(
        functools.partial(fa_kernel, inv_k=1.0 / K),
        out_shape=out_shape,
        grid_spec=grid_spec,
        compiler_params=pltpu.CompilerParams(
            dimension_semantics=("parallel", "parallel", "arbitrary"),
            vmem_limit_bytes=vmem_limit),
    )(x_flat, d_re, d_im)

    return (compress.reshape(group, B, H, W),
            magnitude.reshape(group, B, H, W))


def fa_forward(x, img_dir=None, group=1):
    """Pallas implementation of FA.forward. Returns (x, (compress, magnitude))."""
    del img_dir  # TODO(synk): matplotlib visualization / .png file saving has no Pallas equivalent.
    B, C, H, W = x.shape
    assert C % group == 0
    K = C // group
    # Sublane-tiling constraint on the x block's channel dim: it must equal the full
    # channel dim (group == 1) or be a multiple of 8.
    assert group == 1 or K % 8 == 0, "C // group must be a multiple of 8 when group > 1"

    d_re, d_im = _kron_shifted_dft(H, W)        # cached: host kron + upload once per (H, W)
    compress, magnitude = _fa_intermediates(x, d_re, d_im, group=group)

    # The PyTorch forward returns the input unchanged.
    return x, (compress, magnitude)


if __name__ == "__main__":
    key = jax.random.PRNGKey(0)
    B, C, H, W = 2, 4, 16, 16
    x = jax.random.uniform(key, (B, C, H, W), dtype=jnp.float32)

    out, (compress, magnitude) = fa_forward(x, img_dir="unused")
    jax.block_until_ready((out, compress, magnitude))

    # Forward semantics: output == input.
    assert out.shape == x.shape
    np.testing.assert_array_equal(np.asarray(out), np.asarray(x))

    # Check in-kernel intermediates against a pure-JAX reference (group=1).
    fm_ref = jnp.mean(x, axis=1) + jnp.max(x, axis=1)                      # (B, H, W)
    spec_ref = jnp.fft.fftshift(jnp.fft.fft2(fm_ref), axes=(-2, -1))
    mag_ref = jnp.abs(spec_ref)

    comp_err = float(jnp.max(jnp.abs(compress[0] - fm_ref)))
    mag_err = float(jnp.max(jnp.abs(magnitude[0].astype(jnp.float32) - mag_ref)))
    mag_scale = float(jnp.max(mag_ref))
    assert comp_err < 1e-5, f"channel-pool mismatch: {comp_err}"
    assert mag_err < 2e-2 * mag_scale, f"magnitude mismatch: {mag_err} vs scale {mag_scale}"

    print("KERNEL_OK")
</pallas_src>

<mosaic_0001>
module attributes {stable_mosaic.version = 11 : i64} {
  func.func @fa_kernel(%arg0: i32, %arg1: i32, %arg2: i32, %arg3: memref<2x4x256xf32, #tpu.memory_space<vmem>>, %arg4: memref<256x256xbf16, #tpu.memory_space<vmem>>, %arg5: memref<256x256xbf16, #tpu.memory_space<vmem>>, %arg6: memref<1x2x256xf32, #tpu.memory_space<vmem>>, %arg7: memref<1x2x256xbf16, #tpu.memory_space<vmem>>, %arg8: memref<2x256xf32, #tpu.memory_space<vmem>>, %arg9: memref<2x256xf32, #tpu.memory_space<vmem>>) attributes {dimension_semantics = [#tpu.dimension_semantics<parallel>, #tpu.dimension_semantics<parallel>, #tpu.dimension_semantics<arbitrary>], iteration_bounds = array<i64: 1, 1, 1>, scalar_prefetch = 0 : i64, scratch_operands = 2 : i64, tpu.core_type = #tpu.core_type<tc>, window_params = [{transform_indices = @transform_0, window_bounds = array<i64: 2, 4, 256>}, {pipeline_mode = #tpu.pipeline_mode<synchronous>, transform_indices = @transform_1, window_bounds = array<i64: 256, 256>}, {pipeline_mode = #tpu.pipeline_mode<synchronous>, transform_indices = @transform_2, window_bounds = array<i64: 256, 256>}, {transform_indices = @transform_3, window_bounds = array<i64: 1, 2, 256>}, {transform_indices = @transform_4, window_bounds = array<i64: 1, 2, 256>}]} {
    %c0_i32 = arith.constant 0 : i32
    %0 = arith.cmpi eq, %arg2, %c0_i32 : i32
    %1 = arith.extui %0 : i1 to i32
    %c0_i32_0 = arith.constant 0 : i32
    %2 = arith.cmpi ne, %1, %c0_i32_0 : i32
    scf.if %2 {
      %cst_14 = arith.constant 0.000000e+00 : f32
      %15 = vector.broadcast %cst_14 : f32 to vector<2x256xf32>
      %c0_15 = arith.constant 0 : index
      %c0_16 = arith.constant 0 : index
      %16 = vector.load %arg8[%c0_15, %c0_16] : memref<2x256xf32, #tpu.memory_space<vmem>>, vector<2x256xf32>
      tpu.vector_store %arg8[%c0_15, %c0_16], %15 {strides = array<i32>} : memref<2x256xf32, #tpu.memory_space<vmem>>, vector<2x256xf32>,
      %cst_17 = arith.constant 0xFF800000 : f32
      %17 = vector.broadcast %cst_17 : f32 to vector<2x256xf32>
      %c0_18 = arith.constant 0 : index
      %c0_19 = arith.constant 0 : index
      %18 = vector.load %arg9[%c0_18, %c0_19] : memref<2x256xf32, #tpu.memory_space<vmem>>, vector<2x256xf32>
      tpu.vector_store %arg9[%c0_18, %c0_19], %17 {strides = array<i32>} : memref<2x256xf32, #tpu.memory_space<vmem>>, vector<2x256xf32>,
    } else {
    }
    %c0 = arith.constant 0 : index
    %c0_1 = arith.constant 0 : index
    %c0_2 = arith.constant 0 : index
    %3 = vector.load %arg3[%c0, %c0_1, %c0_2] : memref<2x4x256xf32, #tpu.memory_space<vmem>>, vector<2x4x256xf32>
    %c0_3 = arith.constant 0 : index
    %c0_4 = arith.constant 0 : index
    %4 = vector.load %arg8[%c0_3, %c0_4] : memref<2x256xf32, #tpu.memory_space<vmem>>, vector<2x256xf32>
    %cst = arith.constant dense<0.000000e+00> : vector<2x256xf32>
    %5 = vector.multi_reduction <add>, %3, %cst [1] : vector<2x4x256xf32> to vector<2x256xf32>
    %6 = arith.addf %4, %5 : vector<2x256xf32>
    %c0_5 = arith.constant 0 : index
    %c0_6 = arith.constant 0 : index
    %7 = vector.load %arg8[%c0_5, %c0_6] : memref<2x256xf32, #tpu.memory_space<vmem>>, vector<2x256xf32>
    tpu.vector_store %arg8[%c0_5, %c0_6], %6 {strides = array<i32>} : memref<2x256xf32, #tpu.memory_space<vmem>>, vector<2x256xf32>,
    %c0_7 = arith.constant 0 : index
    %c0_8 = arith.constant 0 : index
    %8 = vector.load %arg9[%c0_7, %c0_8] : memref<2x256xf32, #tpu.memory_space<vmem>>, vector<2x256xf32>
    %cst_9 = arith.constant dense<0xFF800000> : vector<2x256xf32>
    %9 = vector.multi_reduction <maximumf>, %3, %cst_9 [1] : vector<2x4x256xf32> to vector<2x256xf32>
    %10 = arith.maximumf %8, %9 : vector<2x256xf32>
    %c0_10 = arith.constant 0 : index
    %c0_11 = arith.constant 0 : index
    %11 = vector.load %arg9[%c0_10, %c0_11] : memref<2x256xf32, #tpu.memory_space<vmem>>, vector<2x256xf32>
    tpu.vector_store %arg9[%c0_10, %c0_11], %10 {strides = array<i32>} : memref<2x256xf32, #tpu.memory_space<vmem>>, vector<2x256xf32>,
    %c0_i32_12 = arith.constant 0 : i32
    %12 = arith.cmpi eq, %arg2, %c0_i32_12 : i32
    %13 = arith.extui %12 : i1 to i32
    %c0_i32_13 = arith.constant 0 : i32
    %14 = arith.cmpi ne, %13, %c0_i32_13 : i32
    scf.if %14 {
      %c0_14 = arith.constant 0 : index
      %c0_15 = arith.constant 0 : index
      %15 = vector.load %arg8[%c0_14, %c0_15] : memref<2x256xf32, #tpu.memory_space<vmem>>, vector<2x256xf32>
      %cst_16 = arith.constant 2.500000e-01 : f32
      %16 = vector.broadcast %cst_16 : f32 to vector<2x256xf32>
      %17 = arith.mulf %15, %16 : vector<2x256xf32>
      %c0_17 = arith.constant 0 : index
      %c0_18 = arith.constant 0 : index
      %18 = vector.load %arg9[%c0_17, %c0_18] : memref<2x256xf32, #tpu.memory_space<vmem>>, vector<2x256xf32>
      %19 = arith.addf %17, %18 : vector<2x256xf32>
      %c0_19 = arith.constant 0 : index
      %c0_20 = arith.constant 0 : index
      %c0_21 = arith.constant 0 : index
      %20 = vector.load %arg6[%c0_19, %c0_20, %c0_21] : memref<1x2x256xf32, #tpu.memory_space<vmem>>, vector<1x2x256xf32>
      %21 = vector.shape_cast %20 : vector<1x2x256xf32> to vector<2x256xf32>
      %22 = vector.shape_cast %19 : vector<2x256xf32> to vector<1x2x256xf32>
      tpu.vector_store %arg6[%c0_19, %c0_20, %c0_21], %22 {strides = array<i32>} : memref<1x2x256xf32, #tpu.memory_space<vmem>>, vector<1x2x256xf32>,
      %23 = arith.truncf %19 : vector<2x256xf32> to vector<2x256xbf16>
      %c0_22 = arith.constant 0 : index
      %c0_23 = arith.constant 0 : index
      %24 = vector.load %arg4[%c0_22, %c0_23] : memref<256x256xbf16, #tpu.memory_space<vmem>>, vector<256x256xbf16>
      %cst_24 = arith.constant dense<0.000000e+00> : vector<2x256xf32>
      %25 = tpu.matmul %23, %24, %cst_24 {dimension_numbers = #tpu.dot_dimension_numbers<[1], [0], [0], [1], [0, 0, 1, 1], [], []>} : vector<2x256xbf16>, vector<256x256xbf16>, vector<2x256xf32> -> vector<2x256xf32>
      %c0_25 = arith.constant 0 : index
      %c0_26 = arith.constant 0 : index
      %26 = vector.load %arg5[%c0_25, %c0_26] : memref<256x256xbf16, #tpu.memory_space<vmem>>, vector<256x256xbf16>
      %cst_27 = arith.constant dense<0.000000e+00> : vector<2x256xf32>
      %27 = tpu.matmul %23, %26, %cst_27 {dimension_numbers = #tpu.dot_dimension_numbers<[1], [0], [0], [1], [0, 0, 1, 1], [], []>} : vector<2x256xbf16>, vector<256x256xbf16>, vector<2x256xf32> -> vector<2x256xf32>
      %28 = arith.mulf %25, %25 : vector<2x256xf32>
      %29 = arith.mulf %27, %27 : vector<2x256xf32>
      %30 = arith.addf %28, %29 : vector<2x256xf32>
      %31 = math.sqrt %30 : vector<2x256xf32>
      %32 = arith.truncf %31 : vector<2x256xf32> to vector<2x256xbf16>
      %c0_28 = arith.constant 0 : index
      %c0_29 = arith.constant 0 : index
      %c0_30 = arith.constant 0 : index
      %33 = vector.load %arg7[%c0_28, %c0_29, %c0_30] : memref<1x2x256xbf16, #tpu.memory_space<vmem>>, vector<1x2x256xbf16>
      %34 = vector.shape_cast %33 : vector<1x2x256xbf16> to vector<2x256xbf16>
      %35 = vector.shape_cast %32 : vector<2x256xbf16> to vector<1x2x256xbf16>
      tpu.vector_store %arg7[%c0_28, %c0_29, %c0_30], %35 {strides = array<i32>} : memref<1x2x256xbf16, #tpu.memory_space<vmem>>, vector<1x2x256xbf16>,
    } else {
    }
    return
  }
  func.func @transform_0(%arg0: i32, %arg1: i32, %arg2: i32) -> (i32, i32, i32) {
    %c1_i32 = arith.constant 1 : i32
    %0 = arith.muli %arg0, %c1_i32 : i32
    %1 = arith.addi %0, %arg2 : i32
    %c0_i32 = arith.constant 0 : i32
    %c0_i32_0 = arith.constant 0 : i32
    return %arg1, %1, %c0_i32 : i32, i32, i32
  }
  func.func @transform_1(%arg0: i32, %arg1: i32, %arg2: i32) -> (i32, i32) {
    %c0_i32 = arith.constant 0 : i32
    %c0_i32_0 = arith.constant 0 : i32
    %c0_i32_1 = arith.constant 0 : i32
    return %c0_i32, %c0_i32_0 : i32, i32
  }
  func.func @transform_2(%arg0: i32, %arg1: i32, %arg2: i32) -> (i32, i32) {
    %c0_i32 = arith.constant 0 : i32
    %c0_i32_0 = arith.constant 0 : i32
    %c0_i32_1 = arith.constant 0 : i32
    return %c0_i32, %c0_i32_0 : i32, i32
  }
  func.func @transform_3(%arg0: i32, %arg1: i32, %arg2: i32) -> (i32, i32, i32) {
    %c0_i32 = arith.constant 0 : i32
    %c0_i32_0 = arith.constant 0 : i32
    return %arg0, %arg1, %c0_i32 : i32, i32, i32
  }
  func.func @transform_4(%arg0: i32, %arg1: i32, %arg2: i32) -> (i32, i32, i32) {
    %c0_i32 = arith.constant 0 : i32
    %c0_i32_0 = arith.constant 0 : i32
    return %arg0, %arg1, %c0_i32 : i32, i32, i32
  }
}

</mosaic_0001>

<llo_original>
// kernel: _fa_intermediates.1
$region0: #{_fa_intermediates.1}
  #allocation0 [shape = 'u32[]', space=smem, size = 0x4, offset = 0x4, fixed_abs, tag = 'smem constant byte address 0x4 - core index']
  #allocation1 [shape = 'u32[72,128]{1,0:T(1,128)}', space=vmem, size = 0x9000, scoped, tag = 'internal scratch']
  #allocation2 [shape = 'f32[2,256]{1,0:T(2,128)}', space=vmem, size = 0x800, scoped, tag = 'scratch operand']
  #allocation3 [shape = 'f32[2,256]{1,0:T(2,128)}', space=vmem, size = 0x800, scoped, tag = 'scratch operand']
  %s0 = inlined_call_operand.vmem [shape: f32[2,4,256], index: 0, kind: input, shape index: {}]
  %s1 = inlined_call_operand.hbm [shape: bf16[256,256], index: 1, kind: input, shape index: {}]
  %s2 = inlined_call_operand.hbm [shape: bf16[256,256], index: 2, kind: input, shape index: {}]
  %s3 = inlined_call_operand.vmem [shape: f32[1,2,256], index: 3, kind: output, shape index: {0}]
  %s4 = inlined_call_operand.vmem [shape: bf16[1,2,256], index: 4, kind: output, shape index: {1}]
  %5 = xla_tuple %s3, %s4
  %s6 = sld [smem:[#allocation0]]
  $region46: #{_fa_intermediates.1} parent=0
    _
  %s8 = ssub.s32 1, %s6
  %s9 = scalar_select 0, %s8, %s6
  $region1: #{_fa_intermediates.1} parent=0
    #allocation4 [shape = 'u8[131072]{0}', space=vmem, size = 0x20000, scoped, tag = 'input window, operand 1, single buffered']
    #allocation5 [shape = 's32[1]{0}', space=sflag, size = 0x4, scoped, tag = 'scoped memory for _fa_intermediates.1']
    #allocation6 [shape = 'u8[131072]{0}', space=vmem, size = 0x20000, scoped, tag = 'input window, operand 2, single buffered']
    #allocation7 [shape = 's32[1]{0}', space=sflag, size = 0x4, scoped, tag = 'scoped memory for _fa_intermediates.1']
    %10 = vsyncpa [#allocation5], 0
    %11 = vsyncpa [#allocation7], 0
    // Predicated region
    $region2: #{_fa_intermediates.1} parent=1 // pred_check
      _
    $region3: #{_fa_intermediates.1} parent=1 // pred_check_branch
      %13 = sbr.rel (0) target = $region5
    $region4: #{_fa_intermediates.1} parent=1 // pred_region
      %s14 = sadd.s32 0, 0
      %p15 = scmp.lt.s32.totalorder %s14, 0
      %s16 = scalar_select %p15, %s14, 0
      %s17 = smul.addr %s16, 2
      %s18 = smul.addr %s17, 4
      %s19 = scalar_lea.vmem %s0, %s18
      %s20 = sadd.s32 0, 0
    $region5: #{_fa_intermediates.1} parent=1 // pred_fallthru
      _
    // Predicated region
    $region6: #{_fa_intermediates.1} parent=1 // pred_check
      _
    $region7: #{_fa_intermediates.1} parent=1 // pred_check_branch
      %22 = sbr.rel (0) target = $region9
    $region8: #{_fa_intermediates.1} parent=1 // pred_region
      %24 = vsyncadd [#allocation5], 0
      %s25 = sshll.u32 %s1, 4
      %s26 = int_to_ptr.hbm [resolvable:$true] %s25
      %s27 = sshll.u32 [#allocation4], 4
      %s28 = int_to_ptr.vmem [resolvable:$true] %s27
      %33 = dma.hbm_to_vmem [thread:$0]  %s26, 4096, %s28, [#allocation5], 128, 128, 8
    $region9: #{_fa_intermediates.1} parent=1 // pred_fallthru
      _
    // Predicated region
    $region10: #{_fa_intermediates.1} parent=1 // pred_check
      _
    $region11: #{_fa_intermediates.1} parent=1 // pred_check_branch
      %35 = sbr.rel (0) target = $region13
    $region12: #{_fa_intermediates.1} parent=1 // pred_region
      %37 = vsyncadd [#allocation7], 0
      %s38 = sshll.u32 %s2, 4
      %s39 = int_to_ptr.hbm [resolvable:$true] %s38
      %s40 = sshll.u32 [#allocation6], 4
      %s41 = int_to_ptr.vmem [resolvable:$true] %s40
      %46 = dma.hbm_to_vmem [thread:$0]  %s39, 4096, %s41, [#allocation7], 128, 128, 8
    $region13: #{_fa_intermediates.1} parent=1 // pred_fallthru
      _
    // Predicated region
    $region14: #{_fa_intermediates.1} parent=1 // pred_check
      _
    $region15: #{_fa_intermediates.1} parent=1 // pred_check_branch
      %48 = sbr.rel (0) target = $region17
    $region16: #{_fa_intermediates.1} parent=1 // pred_region
      %50 = dma.done [#allocation5], 4096
    $region17: #{_fa_intermediates.1} parent=1 // pred_fallthru
      _
    // Predicated region
    $region18: #{_fa_intermediates.1} parent=1 // pred_check
      _
    $region19: #{_fa_intermediates.1} parent=1 // pred_check_branch
      %52 = sbr.rel (0) target = $region21
    $region20: #{_fa_intermediates.1} parent=1 // pred_region
      %54 = dma.done [#allocation7], 4096
    $region21: #{_fa_intermediates.1} parent=1 // pred_fallthru
      _
    %s55 = sadd.s32 0, 0
    %p56 = scmp.lt.s32.totalorder %s55, 0
    %s57 = scalar_select %p56, %s55, 0
    %s58 = smul.addr %s57, 2
    %s59 = smul.addr %s58, 4
    %s60 = scalar_lea.vmem %s0, %s59
    %s61 = sadd.s32 0, 0
    %p62 = scmp.lt.s32.totalorder %s61, 0
    %s63 = scalar_select %p62, %s61, 0
    %s64 = smul.addr %s63, 2
    %s65 = smul.addr %s64, 4
    %s66 = scalar_lea.vmem %s0, %s65
    %s67 = sadd.s32 0, 0
    %p68 = scmp.eq.s32.totalorder 0, 0
    // Predicated region
    $region22: #{_fa_intermediates.1} parent=1 // pred_check
      %p69 = pneg %p68
    $region23: #{_fa_intermediates.1} parent=1 // pred_check_branch
      %71 = sbr.rel (%p69) target = $region25
    $region24: #{_fa_intermediates.1} parent=1 // pred_region
      %72 = vst [vmem:[#allocation2] sm:$0xf] 0.0
      %73 = vst [vmem:[#allocation3] sm:$0xf] -inf
    $region25: #{_fa_intermediates.1} parent=1 // pred_fallthru
      _
    %v74 = vld [vmem:[%s66] sm:$0xff]
    %v75 = vld [vmem:[%s66 + $0x8] sm:$0xff]
    %v76 = vld [vmem:[#allocation2] sm:$0xf]
    %79 = vst [vmem:[#allocation1] ss:$2 sm:$0xff] %v74
    %v80 = vld.sshfl [vmem:[#allocation1] sm:$0xff pattern:$0x75316420]
    %v81 = vld.sshfl [vmem:[#allocation1 + $0x8] sm:$0xff pattern:$0x75316420]
    %s82 = scalar_lea.vmem [#allocation1], 16
    %83 = vst [vmem:[%s82] ss:$2 sm:$0xff] %v75
    %v84 = vld.sshfl [vmem:[#allocation1 + $0x10] sm:$0xff pattern:$0x75316420]
    %v85 = vld.sshfl [vmem:[#allocation1 + $0x18] sm:$0xff pattern:$0x75316420]
    %vm90 = vcmask 1043456
    %v91 = vsel %vm90, %v80, 0.0
    %v92 = vrot.slane %v91, 4
    %v93 = vadd.f32 %v91, %v92
    %v94 = vrot.slane %v93, 2
    %v95 = vadd.f32 %v93, %v94
    %v96 = vrot.slane %v95, 1
    %v97 = vadd.f32 %v95, %v96
    %v98 = vsel %vm90, %v81, 0.0
    %v99 = vrot.slane %v98, 4
    %v100 = vadd.f32 %v98, %v99
    %v101 = vrot.slane %v100, 2
    %v102 = vadd.f32 %v100, %v101
    %v103 = vrot.slane %v102, 1
    %v104 = vadd.f32 %v102, %v103
    %v105 = vsel %vm90, %v84, 0.0
    %v106 = vrot.slane %v105, 4
    %v107 = vadd.f32 %v105, %v106
    %v108 = vrot.slane %v107, 2
    %v109 = vadd.f32 %v107, %v108
    %v110 = vrot.slane %v109, 1
    %v111 = vadd.f32 %v109, %v110
    %v112 = vsel %vm90, %v85, 0.0
    %v113 = vrot.slane %v112, 4
    %v114 = vadd.f32 %v112, %v113
    %v115 = vrot.slane %v114, 2
    %v116 = vadd.f32 %v114, %v115
    %v117 = vrot.slane %v116, 1
    %v118 = vadd.f32 %v116, %v117
    %v123 = vrot.slane %v104, 6
    %v124 = vrot.slane %v118, 6
    %vm125 = vcmask 1041408
    %v126 = vsel %vm125, %v97, %v123
    %v127 = vsel %vm125, %v111, %v124
    %vm128 = vcmask 1044484
    %v129 = vsel %vm128, %v126, %v126
    %vm130 = vcmask 1046534
    %v131 = vsel %vm130, %v126, %v129
    %v132 = vrot.slane %v127, 7
    %vm133 = vcmask 1041409
    %v134 = vsel %vm133, %v132, %v131
    %vm135 = vcmask 1043459
    %v136 = vsel %vm135, %v132, %v134
    %vm137 = vcmask 1045509
    %v138 = vsel %vm137, %v132, %v136
    %vm139 = vcmask 1047559
    %v140 = vsel %vm139, %v132, %v138
    %v142 = vadd.f32 %v76, %v140
    %143 = vst [vmem:[#allocation2] sm:$0xf] %v142
    %v144 = vld [vmem:[#allocation3] sm:$0xf]
    %145 = vst [vmem:[#allocation1] ss:$2 sm:$0xff] %v74
    %v146 = vld.sshfl [vmem:[#allocation1] sm:$0xff pattern:$0x75316420]
    %v147 = vld.sshfl [vmem:[#allocation1 + $0x8] sm:$0xff pattern:$0x75316420]
    %s148 = scalar_lea.vmem [#allocation1], 16
    %149 = vst [vmem:[%s148] ss:$2 sm:$0xff] %v75
    %v150 = vld.sshfl [vmem:[#allocation1 + $0x10] sm:$0xff pattern:$0x75316420]
    %v151 = vld.sshfl [vmem:[#allocation1 + $0x18] sm:$0xff pattern:$0x75316420]
    %v156 = vsel %vm90, %v146, -inf
    %v157 = vrot.slane %v156, 4
    %v158 = vmax.f32 %v156, %v157
    %v159 = vrot.slane %v158, 2
    %v160 = vmax.f32 %v158, %v159
    %v161 = vrot.slane %v160, 1
    %v162 = vmax.f32 %v160, %v161
    %v163 = vsel %vm90, %v147, -inf
    %v164 = vrot.slane %v163, 4
    %v165 = vmax.f32 %v163, %v164
    %v166 = vrot.slane %v165, 2
    %v167 = vmax.f32 %v165, %v166
    %v168 = vrot.slane %v167, 1
    %v169 = vmax.f32 %v167, %v168
    %v170 = vsel %vm90, %v150, -inf
    %v171 = vrot.slane %v170, 4
    %v172 = vmax.f32 %v170, %v171
    %v173 = vrot.slane %v172, 2
    %v174 = vmax.f32 %v172, %v173
    %v175 = vrot.slane %v174, 1
    %v176 = vmax.f32 %v174, %v175
    %v177 = vsel %vm90, %v151, -inf
    %v178 = vrot.slane %v177, 4
    %v179 = vmax.f32 %v177, %v178
    %v180 = vrot.slane %v179, 2
    %v181 = vmax.f32 %v179, %v180
    %v182 = vrot.slane %v181, 1
    %v183 = vmax.f32 %v181, %v182
    %v188 = vrot.slane %v169, 6
    %v189 = vrot.slane %v183, 6
    %v190 = vsel %vm125, %v162, %v188
    %v191 = vsel %vm125, %v176, %v189
    %v192 = vsel %vm128, %v190, %v190
    %v193 = vsel %vm130, %v190, %v192
    %v194 = vrot.slane %v191, 7
    %v195 = vsel %vm133, %v194, %v193
    %v196 = vsel %vm135, %v194, %v195
    %v197 = vsel %vm137, %v194, %v196
    %v198 = vsel %vm139, %v194, %v197
    %v200 = vmax.f32 %v144, %v198
    %201 = vst [vmem:[#allocation3] sm:$0xf] %v200
    // Predicated region
    $region26: #{_fa_intermediates.1} parent=1 // pred_check
      %p202 = pneg %p68
    $region27: #{_fa_intermediates.1} parent=1 // pred_check_branch
      %204 = sbr.rel (%p202) target = $region29
    $region28: #{_fa_intermediates.1} parent=1 // pred_region
      %v205 = vld [vmem:[#allocation2] sm:$0xf]
      %v206 = vmul.f32 %v205, 0.25
      %v207 = vld [vmem:[#allocation3] sm:$0xf]
      %v208 = vadd.f32 %v206, %v207
      %209 = vst [vmem:[%s3] sm:$0xf] %v208
      %211 = vst [vmem:[#allocation1] ss:$4 sm:$0xff] %v208
      %v212 = vld.sshfl [vmem:[#allocation1] sm:$0xff pattern:$0x73625140]
      %v213 = vld.sshfl [vmem:[#allocation1 + $0x8] sm:$0xff pattern:$0x73625140]
      %v216 = vpack.c.bf16 %v212, %v212
      %v217 = vpack.c.bf16 %v213, %v213
      %v218 = vld [vmem:[#allocation4] sm:$0xff]
      %v219 = vld [vmem:[#allocation4 + $0x8] sm:$0xff]
      %v220 = vld [vmem:[#allocation4 + $0x10] sm:$0xff]
      %v221 = vld [vmem:[#allocation4 + $0x18] sm:$0xff]
      %v222 = vld [vmem:[#allocation4 + $0x20] sm:$0xff]
      %v223 = vld [vmem:[#allocation4 + $0x28] sm:$0xff]
      %v224 = vld [vmem:[#allocation4 + $0x30] sm:$0xff]
      %v225 = vld [vmem:[#allocation4 + $0x38] sm:$0xff]
      %v226 = vld [vmem:[#allocation4 + $0x40] sm:$0xff]
      %v227 = vld [vmem:[#allocation4 + $0x48] sm:$0xff]
      %v228 = vld [vmem:[#allocation4 + $0x50] sm:$0xff]
      %v229 = vld [vmem:[#allocation4 + $0x58] sm:$0xff]
      %v230 = vld [vmem:[#allocation4 + $0x60] sm:$0xff]
      %v231 = vld [vmem:[#allocation4 + $0x68] sm:$0xff]
      %v232 = vld [vmem:[#allocation4 + $0x70] sm:$0xff]
      %v233 = vld [vmem:[#allocation4 + $0x78] sm:$0xff]
      %v234 = vld [vmem:[#allocation4 + $0x80] sm:$0xff]
      %v235 = vld [vmem:[#allocation4 + $0x88] sm:$0xff]
      %v236 = vld [vmem:[#allocation4 + $0x90] sm:$0xff]
      %v237 = vld [vmem:[#allocation4 + $0x98] sm:$0xff]
      %v238 = vld [vmem:[#allocation4 + $0xa0] sm:$0xff]
      %v239 = vld [vmem:[#allocation4 + $0xa8] sm:$0xff]
      %v240 = vld [vmem:[#allocation4 + $0xb0] sm:$0xff]
      %v241 = vld [vmem:[#allocation4 + $0xb8] sm:$0xff]
      %v242 = vld [vmem:[#allocation4 + $0xc0] sm:$0xff]
      %v243 = vld [vmem:[#allocation4 + $0xc8] sm:$0xff]
      %v244 = vld [vmem:[#allocation4 + $0xd0] sm:$0xff]
      %v245 = vld [vmem:[#allocation4 + $0xd8] sm:$0xff]
      %v246 = vld [vmem:[#allocation4 + $0xe0] sm:$0xff]
      %v247 = vld [vmem:[#allocation4 + $0xe8] sm:$0xff]
      %v248 = vld [vmem:[#allocation4 + $0xf0] sm:$0xff]
      %v249 = vld [vmem:[#allocation4 + $0xf8] sm:$0xff]
      %v282 = vunpack.c.l.b16 %v218
      %v283 = vunpack.c.h.b16 %v218
      %v284 = vunpack.c.l.b16 %v219
      %v285 = vunpack.c.h.b16 %v219
      %v286 = vunpack.c.l.b16 %v220
      %v287 = vunpack.c.h.b16 %v220
      %v288 = vunpack.c.l.b16 %v221
      %v289 = vunpack.c.h.b16 %v221
      %v290 = vunpack.c.l.b16 %v222
      %v291 = vunpack.c.h.b16 %v222
      %v292 = vunpack.c.l.b16 %v223
      %v293 = vunpack.c.h.b16 %v223
      %v294 = vunpack.c.l.b16 %v224
      %v295 = vunpack.c.h.b16 %v224
      %v296 = vunpack.c.l.b16 %v225
      %v297 = vunpack.c.h.b16 %v225
      %v298 = vunpack.c.l.b16 %v226
      %v299 = vunpack.c.h.b16 %v226
      %v300 = vunpack.c.l.b16 %v227
      %v301 = vunpack.c.h.b16 %v227
      %v302 = vunpack.c.l.b16 %v228
      %v303 = vunpack.c.h.b16 %v228
      %v304 = vunpack.c.l.b16 %v229
      %v305 = vunpack.c.h.b16 %v229
      %v306 = vunpack.c.l.b16 %v230
      %v307 = vunpack.c.h.b16 %v230
      %v308 = vunpack.c.l.b16 %v231
      %v309 = vunpack.c.h.b16 %v231
      %v310 = vunpack.c.l.b16 %v232
      %v311 = vunpack.c.h.b16 %v232
      %v312 = vunpack.c.l.b16 %v233
      %v313 = vunpack.c.h.b16 %v233
      %v314 = vunpack.c.l.b16 %v234
      %v315 = vunpack.c.h.b16 %v234
      %v316 = vunpack.c.l.b16 %v235
      %v317 = vunpack.c.h.b16 %v235
      %v318 = vunpack.c.l.b16 %v236
      %v319 = vunpack.c.h.b16 %v236
      %v320 = vunpack.c.l.b16 %v237
      %v321 = vunpack.c.h.b16 %v237
      %v322 = vunpack.c.l.b16 %v238
      %v323 = vunpack.c.h.b16 %v238
      %v324 = vunpack.c.l.b16 %v239
      %v325 = vunpack.c.h.b16 %v239
      %v326 = vunpack.c.l.b16 %v240
      %v327 = vunpack.c.h.b16 %v240
      %v328 = vunpack.c.l.b16 %v241
      %v329 = vunpack.c.h.b16 %v241
      %v330 = vunpack.c.l.b16 %v242
      %v331 = vunpack.c.h.b16 %v242
      %v332 = vunpack.c.l.b16 %v243
      %v333 = vunpack.c.h.b16 %v243
      %v334 = vunpack.c.l.b16 %v244
      %v335 = vunpack.c.h.b16 %v244
      %v336 = vunpack.c.l.b16 %v245
      %v337 = vunpack.c.h.b16 %v245
      %v338 = vunpack.c.l.b16 %v246
      %v339 = vunpack.c.h.b16 %v246
      %v340 = vunpack.c.l.b16 %v247
      %v341 = vunpack.c.h.b16 %v247
      %v342 = vunpack.c.l.b16 %v248
      %v343 = vunpack.c.h.b16 %v248
      %v344 = vunpack.c.l.b16 %v249
      %v345 = vunpack.c.h.b16 %v249
      %v346 = vpack.c.b16 %v284, %v282
      %v347 = vpack.c.b16 %v285, %v283
      %v348 = vpack.c.b16 %v288, %v286
      %v349 = vpack.c.b16 %v289, %v287
      %v350 = vpack.c.b16 %v292, %v290
      %v351 = vpack.c.b16 %v293, %v291
      %v352 = vpack.c.b16 %v296, %v294
      %v353 = vpack.c.b16 %v297, %v295
      %v354 = vpack.c.b16 %v300, %v298
      %v355 = vpack.c.b16 %v301, %v299
      %v356 = vpack.c.b16 %v304, %v302
      %v357 = vpack.c.b16 %v305, %v303
      %v358 = vpack.c.b16 %v308, %v306
      %v359 = vpack.c.b16 %v309, %v307
      %v360 = vpack.c.b16 %v312, %v310
      %v361 = vpack.c.b16 %v313, %v311
      %v362 = vpack.c.b16 %v316, %v314
      %v363 = vpack.c.b16 %v317, %v315
      %v364 = vpack.c.b16 %v320, %v318
      %v365 = vpack.c.b16 %v321, %v319
      %v366 = vpack.c.b16 %v324, %v322
      %v367 = vpack.c.b16 %v325, %v323
      %v368 = vpack.c.b16 %v328, %v326
      %v369 = vpack.c.b16 %v329, %v327
      %v370 = vpack.c.b16 %v332, %v330
      %v371 = vpack.c.b16 %v333, %v331
      %v372 = vpack.c.b16 %v336, %v334
      %v373 = vpack.c.b16 %v337, %v335
      %v374 = vpack.c.b16 %v340, %v338
      %v375 = vpack.c.b16 %v341, %v339
      %v376 = vpack.c.b16 %v344, %v342
      %v377 = vpack.c.b16 %v345, %v343
      %410 = vmatpush.bf16.msra.mxu0 %v360
      %411 = vmatpush.bf16.msra.mxu0 %v358
      %412 = vmatpush.bf16.msra.mxu0 %v356
      %413 = vmatpush.bf16.msra.mxu0 %v354
      %414 = vmatpush.bf16.msra.mxu0 %v352
      %415 = vmatpush.bf16.msra.mxu0 %v350
      %416 = vmatpush.bf16.msra.mxu0 %v348
      %417 = vmatpush.bf16.msra.mxu0 %v346
      %418 = vmatmul.bf16.gmra.mxu0 %v216
      %v419 = vpop.f32.mrf.mxu0
      %v420 = vadd.f32 0.0, %v419
      %v421 = vpop.f32.mrf.mxu0
      %422 = vdwg.mxu0
      %423 = vmatpush.bf16.msra.mxu0 %v376
      %424 = vmatpush.bf16.msra.mxu0 %v374
      %425 = vmatpush.bf16.msra.mxu0 %v372
      %426 = vmatpush.bf16.msra.mxu0 %v370
      %427 = vmatpush.bf16.msra.mxu0 %v368
      %428 = vmatpush.bf16.msra.mxu0 %v366
      %429 = vmatpush.bf16.msra.mxu0 %v364
      %430 = vmatpush.bf16.msra.mxu0 %v362
      %431 = vmatmul.bf16.gmra.mxu0 %v217
      %v432 = vpop.f32.mrf.mxu0
      %v433 = vadd.f32 %v420, %v432
      %v434 = vpop.f32.mrf.mxu0
      %435 = vdwg.mxu0
      %436 = vmatpush.bf16.msra.mxu0 %v361
      %437 = vmatpush.bf16.msra.mxu0 %v359
      %438 = vmatpush.bf16.msra.mxu0 %v357
      %439 = vmatpush.bf16.msra.mxu0 %v355
      %440 = vmatpush.bf16.msra.mxu0 %v353
      %441 = vmatpush.bf16.msra.mxu0 %v351
      %442 = vmatpush.bf16.msra.mxu0 %v349
      %443 = vmatpush.bf16.msra.mxu0 %v347
      %444 = vmatmul.bf16.gmra.mxu0 %v216
      %v445 = vpop.f32.mrf.mxu0
      %v446 = vadd.f32 0.0, %v445
      %v447 = vpop.f32.mrf.mxu0
      %448 = vdwg.mxu0
      %449 = vmatpush.bf16.msra.mxu0 %v377
      %450 = vmatpush.bf16.msra.mxu0 %v375
      %451 = vmatpush.bf16.msra.mxu0 %v373
      %452 = vmatpush.bf16.msra.mxu0 %v371
      %453 = vmatpush.bf16.msra.mxu0 %v369
      %454 = vmatpush.bf16.msra.mxu0 %v367
      %455 = vmatpush.bf16.msra.mxu0 %v365
      %456 = vmatpush.bf16.msra.mxu0 %v363
      %457 = vmatmul.bf16.gmra.mxu0 %v217
      %v458 = vpop.f32.mrf.mxu0
      %v459 = vadd.f32 %v446, %v458
      %v460 = vpop.f32.mrf.mxu0
      %461 = vdwg.mxu0
      %v462 = vld [vmem:[#allocation6] sm:$0xff]
      %v463 = vld [vmem:[#allocation6 + $0x8] sm:$0xff]
      %v464 = vld [vmem:[#allocation6 + $0x10] sm:$0xff]
      %v465 = vld [vmem:[#allocation6 + $0x18] sm:$0xff]
      %v466 = vld [vmem:[#allocation6 + $0x20] sm:$0xff]
      %v467 = vld [vmem:[#allocation6 + $0x28] sm:$0xff]
      %v468 = vld [vmem:[#allocation6 + $0x30] sm:$0xff]
      %v469 = vld [vmem:[#allocation6 + $0x38] sm:$0xff]
      %v470 = vld [vmem:[#allocation6 + $0x40] sm:$0xff]
      %v471 = vld [vmem:[#allocation6 + $0x48] sm:$0xff]
      %v472 = vld [vmem:[#allocation6 + $0x50] sm:$0xff]
      %v473 = vld [vmem:[#allocation6 + $0x58] sm:$0xff]
      %v474 = vld [vmem:[#allocation6 + $0x60] sm:$0xff]
      %v475 = vld [vmem:[#allocation6 + $0x68] sm:$0xff]
      %v476 = vld [vmem:[#allocation6 + $0x70] sm:$0xff]
      %v477 = vld [vmem:[#allocation6 + $0x78] sm:$0xff]
      %v478 = vld [vmem:[#allocation6 + $0x80] sm:$0xff]
      %v479 = vld [vmem:[#allocation6 + $0x88] sm:$0xff]
      %v480 = vld [vmem:[#allocation6 + $0x90] sm:$0xff]
      %v481 = vld [vmem:[#allocation6 + $0x98] sm:$0xff]
      %v482 = vld [vmem:[#allocation6 + $0xa0] sm:$0xff]
      %v483 = vld [vmem:[#allocation6 + $0xa8] sm:$0xff]
      %v484 = vld [vmem:[#allocation6 + $0xb0] sm:$0xff]
      %v485 = vld [vmem:[#allocation6 + $0xb8] sm:$0xff]
      %v486 = vld [vmem:[#allocation6 + $0xc0] sm:$0xff]
      %v487 = vld [vmem:[#allocation6 + $0xc8] sm:$0xff]
      %v488 = vld [vmem:[#allocation6 + $0xd0] sm:$0xff]
      %v489 = vld [vmem:[#allocation6 + $0xd8] sm:$0xff]
      %v490 = vld [vmem:[#allocation6 + $0xe0] sm:$0xff]
      %v491 = vld [vmem:[#allocation6 + $0xe8] sm:$0xff]
      %v492 = vld [vmem:[#allocation6 + $0xf0] sm:$0xff]
      %v493 = vld [vmem:[#allocation6 + $0xf8] sm:$0xff]
      %v526 = vunpack.c.l.b16 %v462
      %v527 = vunpack.c.h.b16 %v462
      %v528 = vunpack.c.l.b16 %v463
      %v529 = vunpack.c.h.b16 %v463
      %v530 = vunpack.c.l.b16 %v464
      %v531 = vunpack.c.h.b16 %v464
      %v532 = vunpack.c.l.b16 %v465
      %v533 = vunpack.c.h.b16 %v465
      %v534 = vunpack.c.l.b16 %v466
      %v535 = vunpack.c.h.b16 %v466
      %v536 = vunpack.c.l.b16 %v467
      %v537 = vunpack.c.h.b16 %v467
      %v538 = vunpack.c.l.b16 %v468
      %v539 = vunpack.c.h.b16 %v468
      %v540 = vunpack.c.l.b16 %v469
      %v541 = vunpack.c.h.b16 %v469
      %v542 = vunpack.c.l.b16 %v470
      %v543 = vunpack.c.h.b16 %v470
      %v544 = vunpack.c.l.b16 %v471
      %v545 = vunpack.c.h.b16 %v471
      %v546 = vunpack.c.l.b16 %v472
      %v547 = vunpack.c.h.b16 %v472
      %v548 = vunpack.c.l.b16 %v473
      %v549 = vunpack.c.h.b16 %v473
      %v550 = vunpack.c.l.b16 %v474
      %v551 = vunpack.c.h.b16 %v474
      %v552 = vunpack.c.l.b16 %v475
      %v553 = vunpack.c.h.b16 %v475
      %v554 = vunpack.c.l.b16 %v476
      %v555 = vunpack.c.h.b16 %v476
      %v556 = vunpack.c.l.b16 %v477
      %v557 = vunpack.c.h.b16 %v477
      %v558 = vunpack.c.l.b16 %v478
      %v559 = vunpack.c.h.b16 %v478
      %v560 = vunpack.c.l.b16 %v479
      %v561 = vunpack.c.h.b16 %v479
      %v562 = vunpack.c.l.b16 %v480
      %v563 = vunpack.c.h.b16 %v480
      %v564 = vunpack.c.l.b16 %v481
      %v565 = vunpack.c.h.b16 %v481
      %v566 = vunpack.c.l.b16 %v482
      %v567 = vunpack.c.h.b16 %v482
      %v568 = vunpack.c.l.b16 %v483
      %v569 = vunpack.c.h.b16 %v483
      %v570 = vunpack.c.l.b16 %v484
      %v571 = vunpack.c.h.b16 %v484
      %v572 = vunpack.c.l.b16 %v485
      %v573 = vunpack.c.h.b16 %v485
      %v574 = vunpack.c.l.b16 %v486
      %v575 = vunpack.c.h.b16 %v486
      %v576 = vunpack.c.l.b16 %v487
      %v577 = vunpack.c.h.b16 %v487
      %v578 = vunpack.c.l.b16 %v488
      %v579 = vunpack.c.h.b16 %v488
      %v580 = vunpack.c.l.b16 %v489
      %v581 = vunpack.c.h.b16 %v489
      %v582 = vunpack.c.l.b16 %v490
      %v583 = vunpack.c.h.b16 %v490
      %v584 = vunpack.c.l.b16 %v491
      %v585 = vunpack.c.h.b16 %v491
      %v586 = vunpack.c.l.b16 %v492
      %v587 = vunpack.c.h.b16 %v492
      %v588 = vunpack.c.l.b16 %v493
      %v589 = vunpack.c.h.b16 %v493
      %v590 = vpack.c.b16 %v528, %v526
      %v591 = vpack.c.b16 %v529, %v527
      %v592 = vpack.c.b16 %v532, %v530
      %v593 = vpack.c.b16 %v533, %v531
      %v594 = vpack.c.b16 %v536, %v534
      %v595 = vpack.c.b16 %v537, %v535
      %v596 = vpack.c.b16 %v540, %v538
      %v597 = vpack.c.b16 %v541, %v539
      %v598 = vpack.c.b16 %v544, %v542
      %v599 = vpack.c.b16 %v545, %v543
      %v600 = vpack.c.b16 %v548, %v546
      %v601 = vpack.c.b16 %v549, %v547
      %v602 = vpack.c.b16 %v552, %v550
      %v603 = vpack.c.b16 %v553, %v551
      %v604 = vpack.c.b16 %v556, %v554
      %v605 = vpack.c.b16 %v557, %v555
      %v606 = vpack.c.b16 %v560, %v558
      %v607 = vpack.c.b16 %v561, %v559
      %v608 = vpack.c.b16 %v564, %v562
      %v609 = vpack.c.b16 %v565, %v563
      %v610 = vpack.c.b16 %v568, %v566
      %v611 = vpack.c.b16 %v569, %v567
      %v612 = vpack.c.b16 %v572, %v570
      %v613 = vpack.c.b16 %v573, %v571
      %v614 = vpack.c.b16 %v576, %v574
      %v615 = vpack.c.b16 %v577, %v575
      %v616 = vpack.c.b16 %v580, %v578
      %v617 = vpack.c.b16 %v581, %v579
      %v618 = vpack.c.b16 %v584, %v582
      %v619 = vpack.c.b16 %v585, %v583
      %v620 = vpack.c.b16 %v588, %v586
      %v621 = vpack.c.b16 %v589, %v587
      %654 = vmatpush.bf16.msra.mxu0 %v604
      %655 = vmatpush.bf16.msra.mxu0 %v602
      %656 = vmatpush.bf16.msra.mxu0 %v600
      %657 = vmatpush.bf16.msra.mxu0 %v598
      %658 = vmatpush.bf16.msra.mxu0 %v596
      %659 = vmatpush.bf16.msra.mxu0 %v594
      %660 = vmatpush.bf16.msra.mxu0 %v592
      %661 = vmatpush.bf16.msra.mxu0 %v590
      %662 = vmatmul.bf16.gmra.mxu0 %v216
      %v663 = vpop.f32.mrf.mxu0
      %v664 = vadd.f32 0.0, %v663
      %v665 = vpop.f32.mrf.mxu0
      %666 = vdwg.mxu0
      %667 = vmatpush.bf16.msra.mxu0 %v620
      %668 = vmatpush.bf16.msra.mxu0 %v618
      %669 = vmatpush.bf16.msra.mxu0 %v616
      %670 = vmatpush.bf16.msra.mxu0 %v614
      %671 = vmatpush.bf16.msra.mxu0 %v612
      %672 = vmatpush.bf16.msra.mxu0 %v610
      %673 = vmatpush.bf16.msra.mxu0 %v608
      %674 = vmatpush.bf16.msra.mxu0 %v606
      %675 = vmatmul.bf16.gmra.mxu0 %v217
      %v676 = vpop.f32.mrf.mxu0
      %v677 = vadd.f32 %v664, %v676
      %v678 = vpop.f32.mrf.mxu0
      %679 = vdwg.mxu0
      %680 = vmatpush.bf16.msra.mxu0 %v605
      %681 = vmatpush.bf16.msra.mxu0 %v603
      %682 = vmatpush.bf16.msra.mxu0 %v601
      %683 = vmatpush.bf16.msra.mxu0 %v599
      %684 = vmatpush.bf16.msra.mxu0 %v597
      %685 = vmatpush.bf16.msra.mxu0 %v595
      %686 = vmatpush.bf16.msra.mxu0 %v593
      %687 = vmatpush.bf16.msra.mxu0 %v591
      %688 = vmatmul.bf16.gmra.mxu0 %v216
      %v689 = vpop.f32.mrf.mxu0
      %v690 = vadd.f32 0.0, %v689
      %v691 = vpop.f32.mrf.mxu0
      %692 = vdwg.mxu0
      %693 = vmatpush.bf16.msra.mxu0 %v621
      %694 = vmatpush.bf16.msra.mxu0 %v619
      %695 = vmatpush.bf16.msra.mxu0 %v617
      %696 = vmatpush.bf16.msra.mxu0 %v615
      %697 = vmatpush.bf16.msra.mxu0 %v613
      %698 = vmatpush.bf16.msra.mxu0 %v611
      %699 = vmatpush.bf16.msra.mxu0 %v609
      %700 = vmatpush.bf16.msra.mxu0 %v607
      %701 = vmatmul.bf16.gmra.mxu0 %v217
      %v702 = vpop.f32.mrf.mxu0
      %v703 = vadd.f32 %v690, %v702
      %v704 = vpop.f32.mrf.mxu0
      %705 = vdwg.mxu0
      %v706 = vmul.f32 %v433, %v433
      %v707 = vmul.f32 %v459, %v459
      %v708 = vmul.f32 %v677, %v677
      %v709 = vmul.f32 %v703, %v703
      %v710 = vadd.f32 %v706, %v708
      %v711 = vadd.f32 %v707, %v709
      %v712 = vrsqrt.pop %v710
      %v713 = vmul.f32 %v712, %v710
      %v714 = vmul.f32 %v713, %v712
      %v715 = vmul.f32 0.5, %v714
      %v716 = vsub.f32 1.5, %v715
      %v717 = vmul.f32 %v712, %v716
      %v718 = vmul.f32 %v710, %v717
      %vm719 = vcmp.eq.f32.partialorder %v710, inf
      %v720 = vsel %vm719, %v710, %v718
      %vm721 = vcmp.eq.f32.partialorder %v710, 0.0
      %v722 = vand.u32 %v710, 2147483648
      %v723 = vsel %vm721, %v722, %v720
      %v724 = vrsqrt.pop %v711
      %v725 = vmul.f32 %v724, %v711
      %v726 = vmul.f32 %v725, %v724
      %v727 = vmul.f32 0.5, %v726
      %v728 = vsub.f32 1.5, %v727
      %v729 = vmul.f32 %v724, %v728
      %v730 = vmul.f32 %v711, %v729
      %vm731 = vcmp.eq.f32.partialorder %v711, inf
      %v732 = vsel %vm731, %v711, %v730
      %vm733 = vcmp.eq.f32.partialorder %v711, 0.0
      %v734 = vand.u32 %v711, 2147483648
      %v735 = vsel %vm733, %v734, %v732
      %v736 = vpack.c.bf16 %v735, %v723
      %v738 = vrot.slane %v736, 3
      %vm739 = vcmask 1040384
      %v742 = vsel %vm739, %v736, %v738
      %744 = vst [vmem:[%s4] sm:$0x3] %v742
    $region29: #{_fa_intermediates.1} parent=1 // pred_fallthru
      _
    // Predicated region
    $region30: #{_fa_intermediates.1} parent=1 // pred_check
      _
    $region31: #{_fa_intermediates.1} parent=1 // pred_check_branch
      %746 = sbr.rel (0) target = $region33
    $region32: #{_fa_intermediates.1} parent=1 // pred_region
      _
    $region33: #{_fa_intermediates.1} parent=1 // pred_fallthru
      _
    // Predicated region
    $region34: #{_fa_intermediates.1} parent=1 // pred_check
      _
    $region35: #{_fa_intermediates.1} parent=1 // pred_check_branch
      %748 = sbr.rel (0) target = $region37
    $region36: #{_fa_intermediates.1} parent=1 // pred_region
      _
    $region37: #{_fa_intermediates.1} parent=1 // pred_fallthru
      _
    // Predicated region
    $region38: #{_fa_intermediates.1} parent=1 // pred_check
      _
    $region39: #{_fa_intermediates.1} parent=1 // pred_check_branch
      %750 = sbr.rel (0) target = $region41
    $region40: #{_fa_intermediates.1} parent=1 // pred_region
      _
    $region41: #{_fa_intermediates.1} parent=1 // pred_fallthru
      _
    // Predicated region
    $region42: #{_fa_intermediates.1} parent=1 // pred_check
      _
    $region43: #{_fa_intermediates.1} parent=1 // pred_check_branch
      %752 = sbr.rel (0) target = $region45
    $region44: #{_fa_intermediates.1} parent=1 // pred_region
      _
    $region45: #{_fa_intermediates.1} parent=1 // pred_fallthru
      _
    %753 = vsyncpa [#allocation5], 1
    %754 = vsyncpa [#allocation7], 1

</llo_original>
